<compile_context>
chip_gen: v7x
topology: tpu7x:2x2x1
jax: 0.10.0
libtpu: 0.0.40
codegen_flags: <defaults>
</compile_context>

<pallas_src>
import jax
import jax.numpy as jnp
from jax.experimental import pallas as pl
from jax.experimental.pallas import tpu as pltpu


def _choose_row_tile(m_rows, target, sub=16):
    """Pick (TM, padded_row_count); prefer a TM that divides m_rows exactly."""
    target = max(sub, int(target))
    if m_rows <= target:
        return m_rows, m_rows                       # single full block
    t_max = (target // sub) * sub
    t = t_max
    while t >= sub:
        if m_rows % t == 0:
            break
        t -= sub
    if t >= max(sub, t_max // 4):
        return t, m_rows                            # exact divisor -> no pad copy
    # Awkward row count: pad up (padded rows produce bias-only values which the
    # caller slices off); better than hundreds of tiny overhead-bound steps.
    m_pad = ((m_rows + t_max - 1) // t_max) * t_max
    return t_max, m_pad


def _patch_embed_kernel(x_ref, w_ref, b_ref, o_ref):
    # x_ref: (TM, K) streamed patch tile; w_ref: (K, E) resident weight;
    # b_ref: (1, E) f32 resident bias; o_ref: (TM, E) output tile.
    acc = jnp.dot(x_ref[...], w_ref[...], preferred_element_type=jnp.float32)
    o_ref[...] = (acc + b_ref[...]).astype(o_ref.dtype)


def patch_embed_2d(x, weight, bias, patch_size, *, tile_m=4096,
                   compute_dtype=jnp.bfloat16, out_dtype=None):
    """Forward pass of PatchEmbed2D.

    Args:
      x:      (B, C, H, W) NCHW input, same as PyTorch.
      weight: (E, C, ph, pw) Conv2d weight.
      bias:   (E,).
      patch_size: int (square patches).
      tile_m: target patch-row tile for the projection matmul.
      compute_dtype: streaming dtype for patches/weight (f32 accumulation).
      out_dtype: output dtype; defaults to x.dtype (pass bf16 to halve the
        output HBM stream when the consumer accepts it).

    Returns:
      (B, H//p, W//p, E) -- matches proj(x).permute(0, 2, 3, 1).
    """
    ph = pw = patch_size
    B, C, H, W = x.shape
    E = weight.shape[0]
    Hp, Wp = H // ph, W // pw
    out_dtype = x.dtype if out_dtype is None else jnp.dtype(out_dtype)

    # Conv2d with kernel==stride silently drops remainder rows/cols.
    if (H % ph) or (W % pw):
        x = x[:, :, :Hp * ph, :Wp * pw]

    # --- im2col layout glue (one fused XLA convert+transpose).  The
    # allow_input_fusion flag below lets XLA fold it into the pallas input DMA
    # instead of materializing the (M, K) patch matrix in HBM.
    xp = x.astype(compute_dtype).reshape(B, C, Hp, ph, Wp, pw)
    xp = jnp.transpose(xp, (0, 2, 4, 1, 3, 5)).reshape(B * Hp * Wp, C * ph * pw)

    # Conv2d weight (E, C, ph, pw) -> (K, E); (c, i, j) flattening matches the
    # patch flattening above.  K is NOT padded toward MXU depth (HBM-bound op).
    w2d = weight.reshape(E, C * ph * pw).T.astype(compute_dtype)
    b1d = bias.astype(jnp.float32)

    M, K = xp.shape

    # --- lane-dense output packing: fold r = 128 // E consecutive patches into
    # one output row via a block-diagonal weight.  Pure-metadata reshapes on
    # input/output; stores become full 128-lane writes.
    r = 1
    if E < 128 and (128 % E == 0) and (M % (128 // E) == 0):
        r = 128 // E
        xp = xp.reshape(M // r, r * K)
        w2d = jnp.kron(jnp.eye(r, dtype=w2d.dtype), w2d)   # (r*K, r*E) block-diag
        b1d = jnp.tile(b1d, r)
    b2d = b1d.reshape(1, -1)

    Mr, Kr = xp.shape
    Er = w2d.shape[1]

    # --- row tile: big enough to amortize the ~0.35us/step grid overhead,
    # chosen as a divisor of Mr whenever possible so no pad copy is needed.
    TM, M_pad = _choose_row_tile(Mr, max(16, tile_m // r))
    if M_pad != Mr:
        xp = jnp.pad(xp, ((0, M_pad - Mr), (0, 0)))

    # VMEM budget: double-buffered x/out tiles + resident weight/bias.  At the
    # default tile_m=4096 this stays well under the 16 MiB v5e scoped default;
    # only raise the limit (capped at v7x's 64 MiB physical) for larger tiles.
    isz_in = jnp.dtype(compute_dtype).itemsize
    isz_out = jnp.dtype(out_dtype).itemsize
    est_vmem = (2 * TM * (Kr * isz_in + Er * isz_out)
                + 2 * Kr * Er * isz_in + 2 * Er * 4)
    vmem_limit = None if est_vmem <= (16 << 20) else min(64 << 20, 2 * est_vmem)

    out = pl.pallas_call(
        _patch_embed_kernel,
        out_shape=jax.ShapeDtypeStruct((M_pad, Er), out_dtype),
        grid_spec=pl.GridSpec(
            grid=(M_pad // TM,),
            in_specs=[
                pl.BlockSpec((TM, Kr), lambda i: (i, 0)),   # streamed patch tiles
                pl.BlockSpec((Kr, Er), lambda i: (0, 0)),   # resident weight
                pl.BlockSpec((1, Er), lambda i: (0, 0)),    # resident bias
            ],
            out_specs=pl.BlockSpec((TM, Er), lambda i: (i, 0)),
        ),
        compiler_params=pltpu.CompilerParams(
            dimension_semantics=("parallel",),          # shards grid across v7x TCs
            allow_input_fusion=[True, False, False],    # fuse im2col into input DMA
            vmem_limit_bytes=vmem_limit,
        ),
    )(xp, w2d, b2d)

    if M_pad != Mr:
        out = out[:Mr]
    # Packed rows unfold back to per-patch rows as a pure metadata reshape.
    # TODO(synk): norm_layer defaults to None in the module, so no norm is
    # applied; a fused LayerNorm epilogue could be added if one is configured.
    return out.reshape(B, Hp, Wp, E)


def _reference(x, weight, bias, patch_size):
    # Pure-JAX reference: conv via lax.conv_general_dilated, then NCHW->NHWC.
    y = jax.lax.conv_general_dilated(
        x, weight,
        window_strides=(patch_size, patch_size),
        padding="VALID",
        dimension_numbers=("NCHW", "OIHW", "NCHW"),
    )
    y = y + bias.reshape(1, -1, 1, 1)
    return jnp.transpose(y, (0, 2, 3, 1))


if __name__ == "__main__":
    fwd = jax.jit(patch_embed_2d, static_argnums=(3,),
                  static_argnames=("tile_m", "compute_dtype", "out_dtype"))

    key = jax.random.PRNGKey(0)
    kx, kw, kb, kx2, kw2, kb2 = jax.random.split(key, 6)

    # --- Case 1: small module-consistent shapes (patch 4, C=4, E=32).
    # E=32 < 128 exercises the lane-dense packing path (r=4).
    B, C, H, W = 2, 4, 16, 16
    patch_size, embed_dim = 4, 32
    x = jax.random.normal(kx, (B, C, H, W), dtype=jnp.float32)
    fan_in = C * patch_size * patch_size
    bound = 1.0 / (fan_in ** 0.5)
    weight = jax.random.uniform(kw, (embed_dim, C, patch_size, patch_size),
                                minval=-bound, maxval=bound, dtype=jnp.float32)
    bias = jax.random.uniform(kb, (embed_dim,), minval=-bound, maxval=bound,
                              dtype=jnp.float32)

    ref = jax.block_until_ready(_reference(x, weight, bias, patch_size))

    out_f32 = jax.block_until_ready(
        fwd(x, weight, bias, patch_size, compute_dtype=jnp.float32))
    assert out_f32.shape == (B, H // patch_size, W // patch_size, embed_dim)
    assert jnp.allclose(out_f32, ref, atol=1e-4, rtol=1e-4)

    out_bf16 = jax.block_until_ready(fwd(x, weight, bias, patch_size))
    assert out_bf16.shape == ref.shape
    assert jnp.allclose(out_bf16, ref, atol=5e-2, rtol=5e-2)

    # --- Case 2: E=128 (already lane-dense, no packing), multi-step grid
    # (tile_m=64 -> grid of 4) and bf16 output path.
    B2, C2, H2, W2, E2 = 1, 3, 64, 64, 128
    x2 = jax.random.normal(kx2, (B2, C2, H2, W2), dtype=jnp.float32)
    fan_in2 = C2 * patch_size * patch_size
    bound2 = 1.0 / (fan_in2 ** 0.5)
    w2 = jax.random.uniform(kw2, (E2, C2, patch_size, patch_size),
                            minval=-bound2, maxval=bound2, dtype=jnp.float32)
    b2 = jax.random.uniform(kb2, (E2,), minval=-bound2, maxval=bound2,
                            dtype=jnp.float32)
    ref2 = jax.block_until_ready(_reference(x2, w2, b2, patch_size))
    out2 = jax.block_until_ready(
        fwd(x2, w2, b2, patch_size, tile_m=64, out_dtype=jnp.bfloat16))
    assert out2.shape == ref2.shape
    assert out2.dtype == jnp.bfloat16
    assert jnp.allclose(out2.astype(jnp.float32), ref2, atol=5e-2, rtol=5e-2)

    print("KERNEL_OK")
</pallas_src>

<mosaic_0001>
module attributes {stable_mosaic.version = 11 : i64} {
  func.func @_patch_embed_kernel(%arg0: i32, %arg1: memref<8x256xf32, #tpu.memory_space<vmem>>, %arg2: memref<256x128xf32, #tpu.memory_space<vmem>>, %arg3: memref<1x128xf32, #tpu.memory_space<vmem>>, %arg4: memref<8x128xf32, #tpu.memory_space<vmem>>) attributes {dimension_semantics = [#tpu.dimension_semantics<parallel>], iteration_bounds = array<i64: 1>, scalar_prefetch = 0 : i64, scratch_operands = 0 : i64, tpu.core_type = #tpu.core_type<tc>, window_params = [{transform_indices = @transform_0, window_bounds = array<i64: 8, 256>}, {pipeline_mode = #tpu.pipeline_mode<synchronous>, transform_indices = @transform_1, window_bounds = array<i64: 256, 128>}, {pipeline_mode = #tpu.pipeline_mode<synchronous>, transform_indices = @transform_2, window_bounds = array<i64: 1, 128>}, {transform_indices = @transform_3, window_bounds = array<i64: 8, 128>}]} {
    %c0 = arith.constant 0 : index
    %c0_0 = arith.constant 0 : index
    %0 = vector.load %arg1[%c0, %c0_0] : memref<8x256xf32, #tpu.memory_space<vmem>>, vector<8x256xf32>
    %c0_1 = arith.constant 0 : index
    %c0_2 = arith.constant 0 : index
    %1 = vector.load %arg2[%c0_1, %c0_2] : memref<256x128xf32, #tpu.memory_space<vmem>>, vector<256x128xf32>
    %cst = arith.constant dense<0.000000e+00> : vector<8x128xf32>
    %2 = tpu.matmul %0, %1, %cst {dimension_numbers = #tpu.dot_dimension_numbers<[1], [0], [0], [1], [0, 0, 1, 1], [], []>} : vector<8x256xf32>, vector<256x128xf32>, vector<8x128xf32> -> vector<8x128xf32>
    %c0_3 = arith.constant 0 : index
    %c0_4 = arith.constant 0 : index
    %3 = vector.load %arg3[%c0_3, %c0_4] : memref<1x128xf32, #tpu.memory_space<vmem>>, vector<1x128xf32>
    %4 = vector.broadcast %3 : vector<1x128xf32> to vector<8x128xf32>
    %5 = arith.addf %2, %4 : vector<8x128xf32>
    %c0_5 = arith.constant 0 : index
    %c0_6 = arith.constant 0 : index
    %6 = vector.load %arg4[%c0_5, %c0_6] : memref<8x128xf32, #tpu.memory_space<vmem>>, vector<8x128xf32>
    tpu.vector_store %arg4[%c0_5, %c0_6], %5 {strides = array<i32>} : memref<8x128xf32, #tpu.memory_space<vmem>>, vector<8x128xf32>,
    return
  }
  func.func @transform_0(%arg0: i32) -> (i32, i32) {
    %c0_i32 = arith.constant 0 : i32
    %c0_i32_0 = arith.constant 0 : i32
    return %arg0, %c0_i32 : i32, i32
  }
  func.func @transform_1(%arg0: i32) -> (i32, i32) {
    %c0_i32 = arith.constant 0 : i32
    %c0_i32_0 = arith.constant 0 : i32
    %c0_i32_1 = arith.constant 0 : i32
    return %c0_i32, %c0_i32_0 : i32, i32
  }
  func.func @transform_2(%arg0: i32) -> (i32, i32) {
    %c0_i32 = arith.constant 0 : i32
    %c0_i32_0 = arith.constant 0 : i32
    %c0_i32_1 = arith.constant 0 : i32
    return %c0_i32, %c0_i32_0 : i32, i32
  }
  func.func @transform_3(%arg0: i32) -> (i32, i32) {
    %c0_i32 = arith.constant 0 : i32
    %c0_i32_0 = arith.constant 0 : i32
    return %arg0, %c0_i32 : i32, i32
  }
}

</mosaic_0001>

<llo_original>
// kernel: tile.8
$region0: #{tile.8}
  #allocation0 [shape = 's32[1]{0}', space=sflag, size = 0x4, scoped, tag = 'scoped memory for tile.8']
  %s0 = inlined_call_operand.vmem [shape: f32[32], index: 0, kind: input, shape index: {}]
  %s1 = inlined_call_operand.vmem [shape: f32[4,32], index: 1, kind: output, shape index: {}]
  // Predicated region
  $region2: #{tile.8} parent=0 // pred_check
    _
  $region3: #{tile.8} parent=0 // pred_check_branch
    %3 = sbr.rel (0) target = $region5
  $region4: #{tile.8} parent=0 // pred_region
    _
  $region5: #{tile.8} parent=0 // pred_fallthru
    _
  %v4 = vld [vmem:[%s0] ss:$0 sm:$0xff]
  %5 = vst [vmem:[%s1] sm:$0xf] %v4

// kernel: tile.9
$region0: #{tile.9}
  %s0 = inlined_call_operand.vmem [shape: f32[4,32], index: 0, kind: input, shape index: {}]
  %s1 = inlined_call_operand.vmem [shape: f32[1,128], index: 1, kind: output, shape index: {}]
  $region1: #{tile.9} parent=0
    #allocation0 [shape = 'u8[4096]{0}', space=vmem, size = 0x1000, scoped, tag = 'scoped mem for output reshape']
    #allocation1 [shape = 'u8[4096]{0}', space=vmem, size = 0x1000, scoped, tag = 'scoped mem for input reshape']
    %s3 = sshllo.u32 0, 4
    %v4 = vld [vmem:[%s0] sm:%s3]
    %5 = vst [vmem:[#allocation1] sm:%s3] %v4
    %v6 = vld [vmem:[#allocation1] sm:$0x1]
    %vm7 = vcmask 261120
    %8 = vst.msk [vmem:[#allocation0] sm:$0x1] %vm7, %v6
    %s9 = scalar_lea.vmem [#allocation1], 3
    %v10 = vld [vmem:[%s9] sm:$0x1]
    %11 = vrot.lane.b32.xlu0 %v10, 96
    %v12 = vpop.permute.xlu0 %11
    %vm13 = vcmask 1048320
    %14 = vst.msk [vmem:[#allocation0] sm:$0x1] %vm13, %v12
    %s15 = scalar_lea.vmem [#allocation1], 2
    %v16 = vld [vmem:[%s15] sm:$0x1]
    %17 = vrot.lane.b32.xlu0 %v16, 64
    %v18 = vpop.permute.xlu0 %17
    %vm19 = vcmask 785920
    %20 = vst.msk [vmem:[#allocation0] sm:$0x1] %vm19, %v18
    %s21 = scalar_lea.vmem [#allocation1], 1
    %v22 = vld [vmem:[%s21] sm:$0x1]
    %23 = vrot.lane.b32.xlu0 %v22, 32
    %v24 = vpop.permute.xlu0 %23
    %vm25 = vcmask 523520
    %26 = vst.msk [vmem:[#allocation0] sm:$0x1] %vm25, %v24
    %s28 = sshllo.u32 0, 1
    %v30 = vld [vmem:[#allocation0] sm:%s28]
    %s31 = sshllo.u32 0, 1
    %32 = vst [vmem:[%s1] sm:%s31] %v30

// kernel: patch_embed_2d.1
$region0: #{patch_embed_2d.1}
  #allocation0 [shape = 'u32[]', space=smem, size = 0x4, offset = 0x4, fixed_abs, tag = 'smem constant byte address 0x4 - core index']
  #allocation1 [shape = 'u32[144,128]{1,0:T(1,128)}', space=vmem, size = 0x12000, scoped, tag = 'internal scratch']
  %s0 = inlined_call_operand.vmem [shape: f32[8,256], index: 0, kind: input, shape index: {}]
  %s1 = inlined_call_operand.vmem [shape: f32[256,128], index: 1, kind: input, shape index: {}]
  %s2 = inlined_call_operand.vmem [shape: f32[1,128], index: 2, kind: input, shape index: {}]
  %s3 = inlined_call_operand.vmem [shape: f32[8,128], index: 3, kind: output, shape index: {}]
  %s4 = sld [smem:[#allocation0]]
  $region22: #{patch_embed_2d.1} parent=0
    _
  %s6 = ssub.s32 1, %s4
  %s7 = scalar_select 0, %s6, %s4
  // Predicated region
  $region2: #{patch_embed_2d.1} parent=0 // pred_check
    _
  $region3: #{patch_embed_2d.1} parent=0 // pred_check_branch
    %9 = sbr.rel (0) target = $region5
  $region4: #{patch_embed_2d.1} parent=0 // pred_region
    _
  $region5: #{patch_embed_2d.1} parent=0 // pred_fallthru
    _
  // Predicated region
  $region6: #{patch_embed_2d.1} parent=0 // pred_check
    _
  $region7: #{patch_embed_2d.1} parent=0 // pred_check_branch
    %11 = sbr.rel (0) target = $region9
  $region8: #{patch_embed_2d.1} parent=0 // pred_region
    _
  $region9: #{patch_embed_2d.1} parent=0 // pred_fallthru
    _
  // Predicated region
  $region10: #{patch_embed_2d.1} parent=0 // pred_check
    _
  $region11: #{patch_embed_2d.1} parent=0 // pred_check_branch
    %13 = sbr.rel (0) target = $region13
  $region12: #{patch_embed_2d.1} parent=0 // pred_region
    _
  $region13: #{patch_embed_2d.1} parent=0 // pred_fallthru
    _
  %v14 = vld [vmem:[%s0] sm:$0xff]
  %v15 = vld [vmem:[%s0 + $0x8] sm:$0xff]
  %v16 = vld [vmem:[%s1] sm:$0xff]
  %v17 = vld [vmem:[%s1 + $0x8] sm:$0xff]
  %v18 = vld [vmem:[%s1 + $0x10] sm:$0xff]
  %v19 = vld [vmem:[%s1 + $0x18] sm:$0xff]
  %v20 = vld [vmem:[%s1 + $0x20] sm:$0xff]
  %v21 = vld [vmem:[%s1 + $0x28] sm:$0xff]
  %v22 = vld [vmem:[%s1 + $0x30] sm:$0xff]
  %v23 = vld [vmem:[%s1 + $0x38] sm:$0xff]
  %v24 = vld [vmem:[%s1 + $0x40] sm:$0xff]
  %v25 = vld [vmem:[%s1 + $0x48] sm:$0xff]
  %v26 = vld [vmem:[%s1 + $0x50] sm:$0xff]
  %v27 = vld [vmem:[%s1 + $0x58] sm:$0xff]
  %v28 = vld [vmem:[%s1 + $0x60] sm:$0xff]
  %v29 = vld [vmem:[%s1 + $0x68] sm:$0xff]
  %v30 = vld [vmem:[%s1 + $0x70] sm:$0xff]
  %v31 = vld [vmem:[%s1 + $0x78] sm:$0xff]
  %v32 = vld [vmem:[%s1 + $0x80] sm:$0xff]
  %v33 = vld [vmem:[%s1 + $0x88] sm:$0xff]
  %v34 = vld [vmem:[%s1 + $0x90] sm:$0xff]
  %v35 = vld [vmem:[%s1 + $0x98] sm:$0xff]
  %v36 = vld [vmem:[%s1 + $0xa0] sm:$0xff]
  %v37 = vld [vmem:[%s1 + $0xa8] sm:$0xff]
  %v38 = vld [vmem:[%s1 + $0xb0] sm:$0xff]
  %v39 = vld [vmem:[%s1 + $0xb8] sm:$0xff]
  %v40 = vld [vmem:[%s1 + $0xc0] sm:$0xff]
  %v41 = vld [vmem:[%s1 + $0xc8] sm:$0xff]
  %v42 = vld [vmem:[%s1 + $0xd0] sm:$0xff]
  %v43 = vld [vmem:[%s1 + $0xd8] sm:$0xff]
  %v44 = vld [vmem:[%s1 + $0xe0] sm:$0xff]
  %v45 = vld [vmem:[%s1 + $0xe8] sm:$0xff]
  %v46 = vld [vmem:[%s1 + $0xf0] sm:$0xff]
  %v47 = vld [vmem:[%s1 + $0xf8] sm:$0xff]
  %v48 = vld [vmem:[%s2] sm:$0x1]
  %v50 = vlaneseq
  %v51 = vshrl.u32 %v50, 7
  %v52 = vsub.s32 0, %v51
  %v53 = vrot.slane %v48, %v52
  %55 = vmatprep.subr.mxu0 0.0
  %56 = vmatpush1.msra.mxu0 %v16
  %57 = vmatprep.subr.mxu0 0.0
  %58 = vmatpush1.msra.mxu0 %v17
  %59 = vmatprep.subr.mxu0 0.0
  %60 = vmatpush1.msra.mxu0 %v18
  %61 = vmatprep.subr.mxu0 0.0
  %62 = vmatpush1.msra.mxu0 %v19
  %63 = vmatprep.subr.mxu0 0.0
  %64 = vmatpush1.msra.mxu0 %v20
  %65 = vmatprep.subr.mxu0 0.0
  %66 = vmatpush1.msra.mxu0 %v21
  %67 = vmatprep.subr.mxu0 0.0
  %68 = vmatpush1.msra.mxu0 %v22
  %69 = vmatprep.subr.mxu0 0.0
  %70 = vmatpush1.msra.mxu0 %v23
  %71 = vmatprep.subr.mxu0 0.0
  %72 = vmatpush1.msra.mxu0 %v24
  %73 = vmatprep.subr.mxu0 0.0
  %74 = vmatpush1.msra.mxu0 %v25
  %75 = vmatprep.subr.mxu0 0.0
  %76 = vmatpush1.msra.mxu0 %v26
  %77 = vmatprep.subr.mxu0 0.0
  %78 = vmatpush1.msra.mxu0 %v27
  %79 = vmatprep.subr.mxu0 0.0
  %80 = vmatpush1.msra.mxu0 %v28
  %81 = vmatprep.subr.mxu0 0.0
  %82 = vmatpush1.msra.mxu0 %v29
  %83 = vmatprep.subr.mxu0 0.0
  %84 = vmatpush1.msra.mxu0 %v30
  %85 = vmatprep.subr.mxu0 0.0
  %86 = vmatpush1.msra.mxu0 %v31
  %87 = vmatprep.subr.mxu0 0.0
  %88 = vmatpush1.msra.mxu0 %v32
  %89 = vmatprep.subr.mxu0 0.0
  %90 = vmatpush1.msra.mxu0 %v33
  %91 = vmatprep.subr.mxu0 0.0
  %92 = vmatpush1.msra.mxu0 %v34
  %93 = vmatprep.subr.mxu0 0.0
  %94 = vmatpush1.msra.mxu0 %v35
  %95 = vmatprep.subr.mxu0 0.0
  %96 = vmatpush1.msra.mxu0 %v36
  %97 = vmatprep.subr.mxu0 0.0
  %98 = vmatpush1.msra.mxu0 %v37
  %99 = vmatprep.subr.mxu0 0.0
  %100 = vmatpush1.msra.mxu0 %v38
  %101 = vmatprep.subr.mxu0 0.0
  %102 = vmatpush1.msra.mxu0 %v39
  %103 = vmatprep.subr.mxu0 0.0
  %104 = vmatpush1.msra.mxu0 %v40
  %105 = vmatprep.subr.mxu0 0.0
  %106 = vmatpush1.msra.mxu0 %v41
  %107 = vmatprep.subr.mxu0 0.0
  %108 = vmatpush1.msra.mxu0 %v42
  %109 = vmatprep.subr.mxu0 0.0
  %110 = vmatpush1.msra.mxu0 %v43
  %111 = vmatprep.subr.mxu0 0.0
  %112 = vmatpush1.msra.mxu0 %v44
  %113 = vmatprep.subr.mxu0 0.0
  %114 = vmatpush1.msra.mxu0 %v45
  %115 = vmatprep.subr.mxu0 0.0
  %116 = vmatpush1.msra.mxu0 %v46
  %117 = vmatprep.subr.mxu0 0.0
  %118 = vmatpush1.msra.mxu0 %v47
  %119 = vmatprep.mubr.f32.mxu0 %v15
  %120 = vmatmul.mubr.f32.gmra.mrb[0].mxu0 %v14
  %v121 = vpop.f32.mrb[0].mxu0
  %v122 = vadd.f32 %v53, %v121
  %v123 = vpop.f32.mrb[0].mxu0
  %124 = vdwg.mxu0
  %125 = vst [vmem:[%s3] sm:$0xff] %v122
  // Predicated region
  $region14: #{patch_embed_2d.1} parent=0 // pred_check
    _
  $region15: #{patch_embed_2d.1} parent=0 // pred_check_branch
    %127 = sbr.rel (0) target = $region17
  $region16: #{patch_embed_2d.1} parent=0 // pred_region
    _
  $region17: #{patch_embed_2d.1} parent=0 // pred_fallthru
    _
  // Predicated region
  $region18: #{patch_embed_2d.1} parent=0 // pred_check
    _
  $region19: #{patch_embed_2d.1} parent=0 // pred_check_branch
    %129 = sbr.rel (0) target = $region21
  $region20: #{patch_embed_2d.1} parent=0 // pred_region
    _
  $region21: #{patch_embed_2d.1} parent=0 // pred_fallthru
    _

</llo_original>
